<compile_context>
chip_gen: v5e
topology: v5e:2x2
jax: 0.10.0
libtpu: 0.0.40
codegen_flags: <defaults>
</compile_context>

<pallas_src>
import functools

import jax
import jax.numpy as jnp
from jax.experimental import pallas as pl
from jax.experimental.pallas import tpu as pltpu

LANE = 128        # lane width of a vreg
ROW_ALIGN = 16    # batch-tile row alignment (bf16 input tile needs 16 sublanes)
HIDDEN = 64       # logical hidden width of the PyTorch module
H_PAD = 128       # hidden width padded to lane width
O_PAD = 128       # output width padded to lane width


def _round_up(x, m):
    return (x + m - 1) // m * m


# ---------------------------------------------------------------------------
# Kernel: fused 3-layer MLP on one batch tile.
# ---------------------------------------------------------------------------
def dqn_kernel(x_ref, w1_ref, w2_ref, w3_ref, b_ref, out_ref):
    w_dtype = w1_ref.dtype          # bf16 MXU operand dtype
    b = b_ref[...]                  # (3, 128) f32 packed biases

    # fc1 + ReLU (f32 accumulate, f32 bias/ReLU tail)
    h1 = jnp.dot(x_ref[...], w1_ref[...], preferred_element_type=jnp.float32)
    h1 = jnp.maximum(h1 + b[0:1, :], 0.0)

    # fc2 + ReLU
    h2 = jnp.dot(h1.astype(w_dtype), w2_ref[...],
                 preferred_element_type=jnp.float32)
    h2 = jnp.maximum(h2 + b[1:2, :], 0.0)

    # fc3 (no activation), lane-dense 128-wide store
    out_ref[...] = (
        jnp.dot(h2.astype(w_dtype), w3_ref[...],
                preferred_element_type=jnp.float32) + b[2:3, :]
    ).astype(out_ref.dtype)


# ---------------------------------------------------------------------------
# Jitted wrapper: batch tiling, padding, weight-resident BlockSpecs.
# out_dim / block_batch are STATIC so the trailing slice is legal under jit.
# ---------------------------------------------------------------------------
@functools.partial(jax.jit, static_argnames=("out_dim", "block_batch"))
def _dqn_forward_jit(x, w1, w2, w3, b, *, out_dim, block_batch):
    batch, in_dim = x.shape
    h_pad = w1.shape[1]
    o_pad = w3.shape[1]

    # --- batch-tile selection: even split, minimal padding, >=2 tiles -------
    grid_n = max(1, pl.cdiv(batch, block_batch))
    if batch > ROW_ALIGN:
        grid_n = max(grid_n, 2)            # keep both v7x TensorCores busy
    tb = _round_up(pl.cdiv(batch, grid_n), ROW_ALIGN)
    b_pad = grid_n * tb

    # Pre-cast x to bf16 (halves x DMA bytes, removes in-kernel VPU cast).
    x = x.astype(w1.dtype)
    if b_pad != batch:
        x = jnp.pad(x, ((0, b_pad - batch), (0, 0)))

    # --- VMEM footprint estimate; only raise the limit if v5e default (16MiB)
    # would be exceeded (never happens at the default block_batch).
    est_bytes = (
        2 * tb * in_dim * x.dtype.itemsize          # double-buffered x tile
        + 2 * tb * o_pad * 4                        # double-buffered f32 out tile
        + 2 * (w1.size + w2.size + w3.size) * w1.dtype.itemsize
        + 2 * b.size * 4
        + (1 << 20)                                 # slack
    )
    cp_kwargs = dict(dimension_semantics=("parallel",))
    if est_bytes > 16 * 1024 * 1024:
        cp_kwargs["vmem_limit_bytes"] = int(min(2 * est_bytes, 48 * 1024 * 1024))

    out_padded = pl.pallas_call(
        dqn_kernel,
        out_shape=jax.ShapeDtypeStruct((b_pad, o_pad), jnp.float32),
        grid=(grid_n,),
        in_specs=[
            pl.BlockSpec((tb, in_dim), lambda i: (i, 0)),      # x: tiled batch
            pl.BlockSpec((in_dim, h_pad), lambda i: (0, 0)),   # W1: VMEM-resident
            pl.BlockSpec((h_pad, h_pad), lambda i: (0, 0)),    # W2
            pl.BlockSpec((h_pad, o_pad), lambda i: (0, 0)),    # W3
            pl.BlockSpec((3, h_pad), lambda i: (0, 0)),        # packed biases
        ],
        out_specs=pl.BlockSpec((tb, o_pad), lambda i: (i, 0)),
        compiler_params=pltpu.CompilerParams(**cp_kwargs),
    )(x, w1, w2, w3, b)

    return out_padded[:batch, :out_dim]


def dqn_forward(x, kparams, *, block_batch=1024):
    """x: (batch, input_dim) f32.  kparams: output of prepare_kernel_params."""
    assert block_batch % ROW_ALIGN == 0
    return _dqn_forward_jit(
        x, kparams["w1"], kparams["w2"], kparams["w3"], kparams["b"],
        out_dim=int(kparams["out_dim"]), block_batch=int(block_batch))


# ---------------------------------------------------------------------------
# Parameter construction (PyTorch nn.Linear-style init) and padding/casting.
# ---------------------------------------------------------------------------
def init_dqn_params(key, input_dim, output_dim, hidden=HIDDEN):
    """f32, unpadded, (in, out) layout; init mimics nn.Linear U(-1/sqrt(fan_in), .)."""
    keys = jax.random.split(key, 6)

    def linear(kw, kb, fan_in, fan_out):
        bound = 1.0 / jnp.sqrt(jnp.float32(fan_in))
        w = jax.random.uniform(kw, (fan_in, fan_out), jnp.float32, -bound, bound)
        b = jax.random.uniform(kb, (1, fan_out), jnp.float32, -bound, bound)
        return w, b

    w1, b1 = linear(keys[0], keys[1], input_dim, hidden)
    w2, b2 = linear(keys[2], keys[3], hidden, hidden)
    w3, b3 = linear(keys[4], keys[5], hidden, output_dim)
    return dict(w1=w1, b1=b1, w2=w2, b2=b2, w3=w3, b3=b3)


def prepare_kernel_params(params, *, h_pad=H_PAD, o_pad=O_PAD,
                          weight_dtype=jnp.bfloat16):
    """Zero-pad hidden/output dims to 128, cast weights to bf16, pack biases."""
    assert h_pad == o_pad == LANE, "stacked-bias layout assumes h_pad == o_pad == 128"
    w1, b1 = params["w1"], params["b1"]
    w2, b2 = params["w2"], params["b2"]
    w3, b3 = params["w3"], params["b3"]
    in_dim = w1.shape[0]
    out_dim = int(w3.shape[1])

    def pad2(a, rows, cols):
        return jnp.pad(a, ((0, rows - a.shape[0]), (0, cols - a.shape[1])))

    b_packed = jnp.concatenate(
        [pad2(b1, 1, h_pad), pad2(b2, 1, h_pad), pad2(b3, 1, o_pad)], axis=0
    ).astype(jnp.float32)

    return dict(
        w1=pad2(w1, in_dim, h_pad).astype(weight_dtype),
        w2=pad2(w2, h_pad, h_pad).astype(weight_dtype),
        w3=pad2(w3, h_pad, o_pad).astype(weight_dtype),
        b=b_packed,
        out_dim=out_dim,   # plain Python int; never enters the traced pytree
    )


# ---------------------------------------------------------------------------
# References for correctness checking.
# ---------------------------------------------------------------------------
def dqn_reference_f32(x, params):
    """Exact PyTorch-module semantics in f32 (unpadded params)."""
    h1 = jnp.maximum(x @ params["w1"] + params["b1"], 0.0)
    h2 = jnp.maximum(h1 @ params["w2"] + params["b2"], 0.0)
    return h2 @ params["w3"] + params["b3"]


def dqn_reference_kernel_precision(x, kparams):
    """Replicates the kernel's bf16-operand / f32-accumulate math in plain JAX."""
    wd = kparams["w1"].dtype
    b = kparams["b"]
    xq = x.astype(wd)
    h1 = jnp.maximum(
        jnp.dot(xq, kparams["w1"], preferred_element_type=jnp.float32)
        + b[0:1, :], 0.0)
    h2 = jnp.maximum(
        jnp.dot(h1.astype(wd), kparams["w2"], preferred_element_type=jnp.float32)
        + b[1:2, :], 0.0)
    out = (jnp.dot(h2.astype(wd), kparams["w3"], preferred_element_type=jnp.float32)
           + b[2:3, :])
    return out[:, :kparams["out_dim"]]


if __name__ == "__main__":
    # Small shapes consistent with the module: drone state dim 8, 4 actions.
    batch, input_dim, output_dim = 2, 8, 4

    key = jax.random.PRNGKey(0)
    k_params, k_x, k_xl = jax.random.split(key, 3)

    params_f32 = init_dqn_params(k_params, input_dim, output_dim)
    kparams = prepare_kernel_params(params_f32)

    # --- tiny batch (as the module would be used per environment step) ------
    x = jax.random.normal(k_x, (batch, input_dim), jnp.float32)
    out = jax.block_until_ready(dqn_forward(x, kparams))
    assert out.shape == (batch, output_dim)

    ref_q = dqn_reference_kernel_precision(x, kparams)
    assert jnp.allclose(out, ref_q, atol=1e-4, rtol=1e-4), "mismatch vs quantized ref"
    ref_f = dqn_reference_f32(x, params_f32)
    assert jnp.allclose(out, ref_f, atol=5e-2, rtol=5e-2), "mismatch vs f32 ref"

    # --- larger (replay-buffer-sized) batch exercises the 2-tile grid path --
    big_batch = 300  # non-multiple of the tile to exercise even-split padding
    xl = jax.random.normal(k_xl, (big_batch, input_dim), jnp.float32)
    out_l = jax.block_until_ready(dqn_forward(xl, kparams))
    assert out_l.shape == (big_batch, output_dim)
    ref_l = dqn_reference_kernel_precision(xl, kparams)
    assert jnp.allclose(out_l, ref_l, atol=1e-4, rtol=1e-4), "mismatch (big batch)"

    print("KERNEL_OK")
</pallas_src>

<mosaic_0001>
module attributes {stable_mosaic.version = 11 : i64} {
  func.func @dqn_kernel(%arg0: i32, %arg1: memref<16x8xbf16, #tpu.memory_space<vmem>>, %arg2: memref<8x128xbf16, #tpu.memory_space<vmem>>, %arg3: memref<128x128xbf16, #tpu.memory_space<vmem>>, %arg4: memref<128x128xbf16, #tpu.memory_space<vmem>>, %arg5: memref<3x128xf32, #tpu.memory_space<vmem>>, %arg6: memref<16x128xf32, #tpu.memory_space<vmem>>) attributes {dimension_semantics = [#tpu.dimension_semantics<parallel>], iteration_bounds = array<i64: 1>, scalar_prefetch = 0 : i64, scratch_operands = 0 : i64, tpu.core_type = #tpu.core_type<tc>, window_params = [{transform_indices = @transform_0, window_bounds = array<i64: 16, 8>}, {pipeline_mode = #tpu.pipeline_mode<synchronous>, transform_indices = @transform_1, window_bounds = array<i64: 8, 128>}, {pipeline_mode = #tpu.pipeline_mode<synchronous>, transform_indices = @transform_2, window_bounds = array<i64: 128, 128>}, {pipeline_mode = #tpu.pipeline_mode<synchronous>, transform_indices = @transform_3, window_bounds = array<i64: 128, 128>}, {pipeline_mode = #tpu.pipeline_mode<synchronous>, transform_indices = @transform_4, window_bounds = array<i64: 3, 128>}, {transform_indices = @transform_5, window_bounds = array<i64: 16, 128>}]} {
    %c0 = arith.constant 0 : index
    %c0_0 = arith.constant 0 : index
    %0 = vector.load %arg5[%c0, %c0_0] : memref<3x128xf32, #tpu.memory_space<vmem>>, vector<3x128xf32>
    %c0_1 = arith.constant 0 : index
    %c0_2 = arith.constant 0 : index
    %1 = vector.load %arg1[%c0_1, %c0_2] : memref<16x8xbf16, #tpu.memory_space<vmem>>, vector<16x8xbf16>
    %c0_3 = arith.constant 0 : index
    %c0_4 = arith.constant 0 : index
    %2 = vector.load %arg2[%c0_3, %c0_4] : memref<8x128xbf16, #tpu.memory_space<vmem>>, vector<8x128xbf16>
    %cst = arith.constant dense<0.000000e+00> : vector<16x128xf32>
    %3 = tpu.matmul %1, %2, %cst {dimension_numbers = #tpu.dot_dimension_numbers<[1], [0], [0], [1], [0, 0, 1, 1], [], []>} : vector<16x8xbf16>, vector<8x128xbf16>, vector<16x128xf32> -> vector<16x128xf32>
    %4 = vector.extract_strided_slice %0 {offsets = [0, 0], sizes = [1, 128], strides = [1, 1]} : vector<3x128xf32> to vector<1x128xf32>
    %5 = vector.broadcast %4 : vector<1x128xf32> to vector<16x128xf32>
    %6 = arith.addf %3, %5 : vector<16x128xf32>
    %cst_5 = arith.constant 0.000000e+00 : f32
    %7 = vector.broadcast %cst_5 : f32 to vector<16x128xf32>
    %8 = arith.maximumf %6, %7 : vector<16x128xf32>
    %9 = arith.truncf %8 : vector<16x128xf32> to vector<16x128xbf16>
    %c0_6 = arith.constant 0 : index
    %c0_7 = arith.constant 0 : index
    %10 = vector.load %arg3[%c0_6, %c0_7] : memref<128x128xbf16, #tpu.memory_space<vmem>>, vector<128x128xbf16>
    %cst_8 = arith.constant dense<0.000000e+00> : vector<16x128xf32>
    %11 = tpu.matmul %9, %10, %cst_8 {dimension_numbers = #tpu.dot_dimension_numbers<[1], [0], [0], [1], [0, 0, 1, 1], [], []>} : vector<16x128xbf16>, vector<128x128xbf16>, vector<16x128xf32> -> vector<16x128xf32>
    %12 = vector.extract_strided_slice %0 {offsets = [1, 0], sizes = [1, 128], strides = [1, 1]} : vector<3x128xf32> to vector<1x128xf32>
    %13 = vector.broadcast %12 : vector<1x128xf32> to vector<16x128xf32>
    %14 = arith.addf %11, %13 : vector<16x128xf32>
    %cst_9 = arith.constant 0.000000e+00 : f32
    %15 = vector.broadcast %cst_9 : f32 to vector<16x128xf32>
    %16 = arith.maximumf %14, %15 : vector<16x128xf32>
    %17 = arith.truncf %16 : vector<16x128xf32> to vector<16x128xbf16>
    %c0_10 = arith.constant 0 : index
    %c0_11 = arith.constant 0 : index
    %18 = vector.load %arg4[%c0_10, %c0_11] : memref<128x128xbf16, #tpu.memory_space<vmem>>, vector<128x128xbf16>
    %cst_12 = arith.constant dense<0.000000e+00> : vector<16x128xf32>
    %19 = tpu.matmul %17, %18, %cst_12 {dimension_numbers = #tpu.dot_dimension_numbers<[1], [0], [0], [1], [0, 0, 1, 1], [], []>} : vector<16x128xbf16>, vector<128x128xbf16>, vector<16x128xf32> -> vector<16x128xf32>
    %20 = vector.extract_strided_slice %0 {offsets = [2, 0], sizes = [1, 128], strides = [1, 1]} : vector<3x128xf32> to vector<1x128xf32>
    %21 = vector.broadcast %20 : vector<1x128xf32> to vector<16x128xf32>
    %22 = arith.addf %19, %21 : vector<16x128xf32>
    %c0_13 = arith.constant 0 : index
    %c0_14 = arith.constant 0 : index
    %23 = vector.load %arg6[%c0_13, %c0_14] : memref<16x128xf32, #tpu.memory_space<vmem>>, vector<16x128xf32>
    tpu.vector_store %arg6[%c0_13, %c0_14], %22 {strides = array<i32>} : memref<16x128xf32, #tpu.memory_space<vmem>>, vector<16x128xf32>,
    return
  }
  func.func @transform_0(%arg0: i32) -> (i32, i32) {
    %c0_i32 = arith.constant 0 : i32
    %c0_i32_0 = arith.constant 0 : i32
    return %arg0, %c0_i32 : i32, i32
  }
  func.func @transform_1(%arg0: i32) -> (i32, i32) {
    %c0_i32 = arith.constant 0 : i32
    %c0_i32_0 = arith.constant 0 : i32
    %c0_i32_1 = arith.constant 0 : i32
    return %c0_i32, %c0_i32_0 : i32, i32
  }
  func.func @transform_2(%arg0: i32) -> (i32, i32) {
    %c0_i32 = arith.constant 0 : i32
    %c0_i32_0 = arith.constant 0 : i32
    %c0_i32_1 = arith.constant 0 : i32
    return %c0_i32, %c0_i32_0 : i32, i32
  }
  func.func @transform_3(%arg0: i32) -> (i32, i32) {
    %c0_i32 = arith.constant 0 : i32
    %c0_i32_0 = arith.constant 0 : i32
    %c0_i32_1 = arith.constant 0 : i32
    return %c0_i32, %c0_i32_0 : i32, i32
  }
  func.func @transform_4(%arg0: i32) -> (i32, i32) {
    %c0_i32 = arith.constant 0 : i32
    %c0_i32_0 = arith.constant 0 : i32
    %c0_i32_1 = arith.constant 0 : i32
    return %c0_i32, %c0_i32_0 : i32, i32
  }
  func.func @transform_5(%arg0: i32) -> (i32, i32) {
    %c0_i32 = arith.constant 0 : i32
    %c0_i32_0 = arith.constant 0 : i32
    return %arg0, %c0_i32 : i32, i32
  }
}

</mosaic_0001>

<llo_original>
// kernel: _dqn_forward_jit.1
$region0: #{_dqn_forward_jit.1}
  #allocation0 [shape = 'u32[]', space=smem, size = 0x4, offset = 0x4, fixed_abs, tag = 'smem constant byte address 0x4 - core index']
  #allocation1 [shape = 'u32[72,128]{1,0:T(1,128)}', space=vmem, size = 0x9000, scoped, tag = 'internal scratch']
  %s0 = inlined_call_operand.vmem [shape: bf16[16,8], index: 0, kind: input, shape index: {}]
  %s1 = inlined_call_operand.vmem [shape: bf16[8,128], index: 1, kind: input, shape index: {}]
  %s2 = inlined_call_operand.hbm [shape: bf16[128,128], index: 2, kind: input, shape index: {}]
  %s3 = inlined_call_operand.hbm [shape: bf16[128,128], index: 3, kind: input, shape index: {}]
  %s4 = inlined_call_operand.vmem [shape: f32[3,128], index: 4, kind: input, shape index: {}]
  %s5 = inlined_call_operand.vmem [shape: f32[16,128], index: 5, kind: output, shape index: {}]
  %s6 = sld [smem:[#allocation0]]
  $region38: #{_dqn_forward_jit.1} parent=0
    _
  %s8 = ssub.s32 1, %s6
  %s9 = scalar_select 0, %s8, %s6
  $region1: #{_dqn_forward_jit.1} parent=0
    #allocation2 [shape = 'u8[32768]{0}', space=vmem, size = 0x8000, scoped, tag = 'input window, operand 2, single buffered']
    #allocation3 [shape = 's32[1]{0}', space=sflag, size = 0x4, scoped, tag = 'scoped memory for _dqn_forward_jit.1']
    #allocation4 [shape = 'u8[32768]{0}', space=vmem, size = 0x8000, scoped, tag = 'input window, operand 3, single buffered']
    #allocation5 [shape = 's32[1]{0}', space=sflag, size = 0x4, scoped, tag = 'scoped memory for _dqn_forward_jit.1']
    %10 = vsyncpa [#allocation3], 0
    %11 = vsyncpa [#allocation5], 0
    // Predicated region
    $region2: #{_dqn_forward_jit.1} parent=1 // pred_check
      _
    $region3: #{_dqn_forward_jit.1} parent=1 // pred_check_branch
      %13 = sbr.rel (0) target = $region5
    $region4: #{_dqn_forward_jit.1} parent=1 // pred_region
      _
    $region5: #{_dqn_forward_jit.1} parent=1 // pred_fallthru
      _
    // Predicated region
    $region6: #{_dqn_forward_jit.1} parent=1 // pred_check
      _
    $region7: #{_dqn_forward_jit.1} parent=1 // pred_check_branch
      %15 = sbr.rel (0) target = $region9
    $region8: #{_dqn_forward_jit.1} parent=1 // pred_region
      _
    $region9: #{_dqn_forward_jit.1} parent=1 // pred_fallthru
      _
    // Predicated region
    $region10: #{_dqn_forward_jit.1} parent=1 // pred_check
      _
    $region11: #{_dqn_forward_jit.1} parent=1 // pred_check_branch
      %17 = sbr.rel (0) target = $region13
    $region12: #{_dqn_forward_jit.1} parent=1 // pred_region
      %19 = vsyncadd [#allocation3], 0
      %s20 = sshll.u32 %s2, 4
      %s21 = int_to_ptr.hbm [resolvable:$true] %s20
      %s22 = sshll.u32 [#allocation2], 4
      %s23 = int_to_ptr.vmem [resolvable:$true] %s22
      %28 = dma.hbm_to_vmem [thread:$0]  %s21, 1024, %s23, [#allocation3], 64, 64, 4
    $region13: #{_dqn_forward_jit.1} parent=1 // pred_fallthru
      _
    // Predicated region
    $region14: #{_dqn_forward_jit.1} parent=1 // pred_check
      _
    $region15: #{_dqn_forward_jit.1} parent=1 // pred_check_branch
      %30 = sbr.rel (0) target = $region17
    $region16: #{_dqn_forward_jit.1} parent=1 // pred_region
      %32 = vsyncadd [#allocation5], 0
      %s33 = sshll.u32 %s3, 4
      %s34 = int_to_ptr.hbm [resolvable:$true] %s33
      %s35 = sshll.u32 [#allocation4], 4
      %s36 = int_to_ptr.vmem [resolvable:$true] %s35
      %41 = dma.hbm_to_vmem [thread:$0]  %s34, 1024, %s36, [#allocation5], 64, 64, 4
    $region17: #{_dqn_forward_jit.1} parent=1 // pred_fallthru
      _
    // Predicated region
    $region18: #{_dqn_forward_jit.1} parent=1 // pred_check
      _
    $region19: #{_dqn_forward_jit.1} parent=1 // pred_check_branch
      %43 = sbr.rel (0) target = $region21
    $region20: #{_dqn_forward_jit.1} parent=1 // pred_region
      _
    $region21: #{_dqn_forward_jit.1} parent=1 // pred_fallthru
      _
    // Predicated region
    $region22: #{_dqn_forward_jit.1} parent=1 // pred_check
      _
    $region23: #{_dqn_forward_jit.1} parent=1 // pred_check_branch
      %45 = sbr.rel (0) target = $region25
    $region24: #{_dqn_forward_jit.1} parent=1 // pred_region
      %47 = dma.done [#allocation3], 1024
    $region25: #{_dqn_forward_jit.1} parent=1 // pred_fallthru
      _
    // Predicated region
    $region26: #{_dqn_forward_jit.1} parent=1 // pred_check
      _
    $region27: #{_dqn_forward_jit.1} parent=1 // pred_check_branch
      %49 = sbr.rel (0) target = $region29
    $region28: #{_dqn_forward_jit.1} parent=1 // pred_region
      %51 = dma.done [#allocation5], 1024
    $region29: #{_dqn_forward_jit.1} parent=1 // pred_fallthru
      _
    %v53 = vld [vmem:[%s4] sm:$0x7]
    %v54 = vld [vmem:[%s0] sm:$0xf]
    %v55 = vld [vmem:[%s0 + $0x4] sm:$0xf]
    %v56 = vld [vmem:[%s1] sm:$0xf]
    %v57 = vperm.slane %v53, 0
    %v60 = vunpack.c.l.b16 %v54
    %v61 = vunpack.c.l.b16 %v55
    %v62 = vpack.c.b16 %v61, %v60
    %vm63 = vcmask 64512
    %v65 = vsel %vm63, %v62, 0
    %vm67 = vcmask 1043456
    %v69 = vsel %vm67, %v56, 0
    %71 = vmatpush.bf16.msra.mxu0 0
    %72 = vmatpush.bf16.msra.mxu0 0
    %73 = vmatpush.bf16.msra.mxu0 0
    %74 = vmatpush.bf16.msra.mxu0 0
    %75 = vmatpush.bf16.msra.mxu0 0
    %76 = vmatpush.bf16.msra.mxu0 0
    %77 = vmatpush.bf16.msra.mxu0 0
    %78 = vmatpush.bf16.msra.mxu0 %v69
    %79 = vmatmul.bf16.gmra.mxu0 %v65
    %v80 = vpop.f32.mrf.mxu0
    %v81 = vadd.f32 %v57, %v80
    %v82 = vpop.f32.mrf.mxu0
    %v83 = vadd.f32 %v57, %v82
    %84 = vdwg.mxu0
    %v85 = vmax.f32 %v81, 0.0
    %v86 = vmax.f32 %v83, 0.0
    %v87 = vpack.c.bf16 %v86, %v85
    %v88 = vld [vmem:[#allocation2] sm:$0xf]
    %v89 = vld [vmem:[#allocation2 + $0x4] sm:$0xf]
    %v90 = vld [vmem:[#allocation2 + $0x8] sm:$0xf]
    %v91 = vld [vmem:[#allocation2 + $0xc] sm:$0xf]
    %v92 = vld [vmem:[#allocation2 + $0x10] sm:$0xf]
    %v93 = vld [vmem:[#allocation2 + $0x14] sm:$0xf]
    %v94 = vld [vmem:[#allocation2 + $0x18] sm:$0xf]
    %v95 = vld [vmem:[#allocation2 + $0x1c] sm:$0xf]
    %v96 = vld [vmem:[#allocation2 + $0x20] sm:$0xf]
    %v97 = vld [vmem:[#allocation2 + $0x24] sm:$0xf]
    %v98 = vld [vmem:[#allocation2 + $0x28] sm:$0xf]
    %v99 = vld [vmem:[#allocation2 + $0x2c] sm:$0xf]
    %v100 = vld [vmem:[#allocation2 + $0x30] sm:$0xf]
    %v101 = vld [vmem:[#allocation2 + $0x34] sm:$0xf]
    %v102 = vld [vmem:[#allocation2 + $0x38] sm:$0xf]
    %v103 = vld [vmem:[#allocation2 + $0x3c] sm:$0xf]
    %v104 = vperm.slane %v53, 1
    %v121 = vunpack.c.l.b16 %v88
    %v122 = vunpack.c.l.b16 %v89
    %v123 = vunpack.c.l.b16 %v90
    %v124 = vunpack.c.l.b16 %v91
    %v125 = vunpack.c.l.b16 %v92
    %v126 = vunpack.c.l.b16 %v93
    %v127 = vunpack.c.l.b16 %v94
    %v128 = vunpack.c.l.b16 %v95
    %v129 = vunpack.c.l.b16 %v96
    %v130 = vunpack.c.l.b16 %v97
    %v131 = vunpack.c.l.b16 %v98
    %v132 = vunpack.c.l.b16 %v99
    %v133 = vunpack.c.l.b16 %v100
    %v134 = vunpack.c.l.b16 %v101
    %v135 = vunpack.c.l.b16 %v102
    %v136 = vunpack.c.l.b16 %v103
    %v137 = vpack.c.b16 %v122, %v121
    %v138 = vpack.c.b16 %v124, %v123
    %v139 = vpack.c.b16 %v126, %v125
    %v140 = vpack.c.b16 %v128, %v127
    %v141 = vpack.c.b16 %v130, %v129
    %v142 = vpack.c.b16 %v132, %v131
    %v143 = vpack.c.b16 %v134, %v133
    %v144 = vpack.c.b16 %v136, %v135
    %153 = vmatpush.bf16.msra.mxu0 %v144
    %154 = vmatpush.bf16.msra.mxu0 %v143
    %155 = vmatpush.bf16.msra.mxu0 %v142
    %156 = vmatpush.bf16.msra.mxu0 %v141
    %157 = vmatpush.bf16.msra.mxu0 %v140
    %158 = vmatpush.bf16.msra.mxu0 %v139
    %159 = vmatpush.bf16.msra.mxu0 %v138
    %160 = vmatpush.bf16.msra.mxu0 %v137
    %161 = vmatmul.bf16.gmra.mxu0 %v87
    %v162 = vpop.f32.mrf.mxu0
    %v163 = vadd.f32 %v104, %v162
    %v164 = vpop.f32.mrf.mxu0
    %v165 = vadd.f32 %v104, %v164
    %166 = vdwg.mxu0
    %v167 = vmax.f32 %v163, 0.0
    %v168 = vmax.f32 %v165, 0.0
    %v169 = vpack.c.bf16 %v168, %v167
    %v170 = vld [vmem:[#allocation4] sm:$0xf]
    %v171 = vld [vmem:[#allocation4 + $0x4] sm:$0xf]
    %v172 = vld [vmem:[#allocation4 + $0x8] sm:$0xf]
    %v173 = vld [vmem:[#allocation4 + $0xc] sm:$0xf]
    %v174 = vld [vmem:[#allocation4 + $0x10] sm:$0xf]
    %v175 = vld [vmem:[#allocation4 + $0x14] sm:$0xf]
    %v176 = vld [vmem:[#allocation4 + $0x18] sm:$0xf]
    %v177 = vld [vmem:[#allocation4 + $0x1c] sm:$0xf]
    %v178 = vld [vmem:[#allocation4 + $0x20] sm:$0xf]
    %v179 = vld [vmem:[#allocation4 + $0x24] sm:$0xf]
    %v180 = vld [vmem:[#allocation4 + $0x28] sm:$0xf]
    %v181 = vld [vmem:[#allocation4 + $0x2c] sm:$0xf]
    %v182 = vld [vmem:[#allocation4 + $0x30] sm:$0xf]
    %v183 = vld [vmem:[#allocation4 + $0x34] sm:$0xf]
    %v184 = vld [vmem:[#allocation4 + $0x38] sm:$0xf]
    %v185 = vld [vmem:[#allocation4 + $0x3c] sm:$0xf]
    %v186 = vperm.slane %v53, 2
    %v203 = vunpack.c.l.b16 %v170
    %v204 = vunpack.c.l.b16 %v171
    %v205 = vunpack.c.l.b16 %v172
    %v206 = vunpack.c.l.b16 %v173
    %v207 = vunpack.c.l.b16 %v174
    %v208 = vunpack.c.l.b16 %v175
    %v209 = vunpack.c.l.b16 %v176
    %v210 = vunpack.c.l.b16 %v177
    %v211 = vunpack.c.l.b16 %v178
    %v212 = vunpack.c.l.b16 %v179
    %v213 = vunpack.c.l.b16 %v180
    %v214 = vunpack.c.l.b16 %v181
    %v215 = vunpack.c.l.b16 %v182
    %v216 = vunpack.c.l.b16 %v183
    %v217 = vunpack.c.l.b16 %v184
    %v218 = vunpack.c.l.b16 %v185
    %v219 = vpack.c.b16 %v204, %v203
    %v220 = vpack.c.b16 %v206, %v205
    %v221 = vpack.c.b16 %v208, %v207
    %v222 = vpack.c.b16 %v210, %v209
    %v223 = vpack.c.b16 %v212, %v211
    %v224 = vpack.c.b16 %v214, %v213
    %v225 = vpack.c.b16 %v216, %v215
    %v226 = vpack.c.b16 %v218, %v217
    %235 = vmatpush.bf16.msra.mxu0 %v226
    %236 = vmatpush.bf16.msra.mxu0 %v225
    %237 = vmatpush.bf16.msra.mxu0 %v224
    %238 = vmatpush.bf16.msra.mxu0 %v223
    %239 = vmatpush.bf16.msra.mxu0 %v222
    %240 = vmatpush.bf16.msra.mxu0 %v221
    %241 = vmatpush.bf16.msra.mxu0 %v220
    %242 = vmatpush.bf16.msra.mxu0 %v219
    %243 = vmatmul.bf16.gmra.mxu0 %v169
    %v244 = vpop.f32.mrf.mxu0
    %v245 = vadd.f32 %v186, %v244
    %v246 = vpop.f32.mrf.mxu0
    %v247 = vadd.f32 %v186, %v246
    %248 = vdwg.mxu0
    %249 = vst [vmem:[%s5] sm:$0xff] %v245
    %250 = vst [vmem:[%s5 + $0x8] sm:$0xff] %v247
    // Predicated region
    $region30: #{_dqn_forward_jit.1} parent=1 // pred_check
      _
    $region31: #{_dqn_forward_jit.1} parent=1 // pred_check_branch
      %252 = sbr.rel (0) target = $region33
    $region32: #{_dqn_forward_jit.1} parent=1 // pred_region
      _
    $region33: #{_dqn_forward_jit.1} parent=1 // pred_fallthru
      _
    // Predicated region
    $region34: #{_dqn_forward_jit.1} parent=1 // pred_check
      _
    $region35: #{_dqn_forward_jit.1} parent=1 // pred_check_branch
      %254 = sbr.rel (0) target = $region37
    $region36: #{_dqn_forward_jit.1} parent=1 // pred_region
      _
    $region37: #{_dqn_forward_jit.1} parent=1 // pred_fallthru
      _
    %255 = vsyncpa [#allocation3], 1
    %256 = vsyncpa [#allocation5], 1

</llo_original>
